<compile_context>
chip_gen: v6e
topology: v6e:2x2x1
jax: 0.10.0
libtpu: 0.0.40
codegen_flags: <defaults>
</compile_context>

<pallas_src>
import functools

import jax
import jax.numpy as jnp
from jax.experimental import pallas as pl
from jax.experimental.pallas import tpu as pltpu


# ----------------------------------------------------------------------------
# Pallas kernel: 4x (GCNConv + tanh), global max/mean pool, final Linear.
# ----------------------------------------------------------------------------
def gcn_kernel(a_ref, x_ref, w0_ref, w123_ref, smalls_ref, mask_ref, out_ref,
               *, num_graphs):
    bf16, f32 = jnp.bfloat16, jnp.float32

    a = a_ref[...]                                    # (N, N) bf16
    x = x_ref[...]                                    # (N, F) bf16

    # ---- layer 0, reordered: (a @ x) @ W0 + b0, tanh   (F << E) ----
    ax = jnp.dot(a, x, preferred_element_type=f32)                       # (N, F) f32
    h = jnp.dot(ax.astype(bf16), w0_ref[...], preferred_element_type=f32)
    h = jnp.tanh(h + smalls_ref[0:1, :])                                 # (N, E) f32

    # ---- layers 1..3: a @ (h @ Wi) + bi, tanh (bf16 in / f32 accumulate) ----
    for i in range(3):
        hw = jnp.dot(h.astype(bf16), w123_ref[i], preferred_element_type=f32)
        agg = jnp.dot(a, hw.astype(bf16), preferred_element_type=f32)
        h = jnp.tanh(agg + smalls_ref[i + 1:i + 2, :])                   # (N, E) f32

    # ---- pooling + final Linear (all f32) ----
    # out[b] = max_pool[b] . w_max  +  mean_pool[b] . w_mean  +  bout
    # mean branch reassociated: (sum_i h[i]/cnt) . w_mean == sum_i (h[i].w_mean)/cnt,
    # so compute hv = h . w_mean once for all nodes, then a masked per-graph sum.
    m = mask_ref[...]                                 # (N, B) f32 one-hot
    w_max = smalls_ref[4:5, :]                        # (1, E)
    w_mean = smalls_ref[5:6, :]                       # (1, E)
    bout = smalls_ref[6:7, 0:1]                       # (1, 1)

    hv = jnp.sum(h * w_mean, axis=1, keepdims=True)   # (N, 1)

    neg = jnp.float32(-3.0e38)
    rows = []
    for b in range(num_graphs):                       # static, tiny
        col = m[:, b:b + 1]                                              # (N, 1)
        cnt = jnp.maximum(jnp.sum(col, axis=0, keepdims=True), 1.0)      # (1, 1)
        mean_c = jnp.sum(hv * col, axis=0, keepdims=True) / cnt          # (1, 1)
        mx = jnp.max(jnp.where(col > 0.5, h, neg), axis=0, keepdims=True)  # (1, E)
        max_c = jnp.sum(mx * w_max, axis=1, keepdims=True)               # (1, 1)
        rows.append(max_c + mean_c)
    out_ref[...] = jnp.concatenate(rows, axis=0) + bout                  # (B, 1)


# ----------------------------------------------------------------------------
# Wrapper: builds a_hat / mask (plain-JAX glue), packs operands, calls the kernel.
# ----------------------------------------------------------------------------
@functools.partial(jax.jit, static_argnames=("num_graphs",))
def gcn_forward(x, edge_index, batch_index, params, *, num_graphs):
    N = x.shape[0]
    E = params["w1"].shape[0]

    # dense normalized adjacency  D^-1/2 (A + I) D^-1/2
    src, dst = edge_index[0], edge_index[1]
    adj = jnp.zeros((N, N), jnp.float32).at[dst, src].set(1.0)   # message j -> i
    adj = adj + jnp.eye(N, dtype=jnp.float32)                    # self loops
    deg = jnp.sum(adj, axis=1)
    dinv = jnp.where(deg > 0, 1.0 / jnp.sqrt(deg), 0.0)
    a_hat = (dinv[:, None] * adj * dinv[None, :]).astype(jnp.bfloat16)

    # bf16 matmul operands (f32 accumulation happens in-kernel)
    x_bf = x.astype(jnp.bfloat16)
    w0_bf = params["w0"].astype(jnp.bfloat16)
    w123_bf = jnp.stack(
        [params["w1"], params["w2"], params["w3"]], axis=0).astype(jnp.bfloat16)

    # pack all tiny f32 operands into one (8, E) array -> one DMA instead of many
    #   rows 0..3: b0..b3   row 4: wout[:E]   row 5: wout[E:]   row 6,0: bout
    smalls = jnp.zeros((8, E), jnp.float32)
    smalls = smalls.at[0, :].set(params["b0"][0])
    smalls = smalls.at[1, :].set(params["b1"][0])
    smalls = smalls.at[2, :].set(params["b2"][0])
    smalls = smalls.at[3, :].set(params["b3"][0])
    smalls = smalls.at[4, :].set(params["wout"][:E, 0])
    smalls = smalls.at[5, :].set(params["wout"][E:, 0])
    smalls = smalls.at[6, 0].set(params["bout"][0, 0])

    # (N, B) one-hot assignment: column layout avoids an in-kernel transpose
    mask_t = (batch_index[:, None] == jnp.arange(num_graphs)[None, :]
              ).astype(jnp.float32)

    vmem = pl.BlockSpec(memory_space=pltpu.MemorySpace.VMEM)
    kernel = functools.partial(gcn_kernel, num_graphs=num_graphs)
    return pl.pallas_call(
        kernel,
        out_shape=jax.ShapeDtypeStruct((num_graphs, 1), jnp.float32),
        in_specs=[vmem] * 6,
        out_specs=vmem,
        compiler_params=pltpu.CompilerParams(
            vmem_limit_bytes=32 * 1024 * 1024),
    )(a_hat, x_bf, w0_bf, w123_bf, smalls, mask_t)


# ----------------------------------------------------------------------------
# Pure-JAX reference (same math, same bf16 matmul boundaries) for correctness.
# ----------------------------------------------------------------------------
def gcn_reference(x, edge_index, batch_index, params, *, num_graphs):
    N = x.shape[0]
    E = params["w1"].shape[0]
    src, dst = edge_index[0], edge_index[1]
    adj = jnp.zeros((N, N), jnp.float32).at[dst, src].set(1.0)
    adj = adj + jnp.eye(N, dtype=jnp.float32)
    deg = jnp.sum(adj, axis=1)
    dinv = jnp.where(deg > 0, 1.0 / jnp.sqrt(deg), 0.0)
    a_hat = dinv[:, None] * adj * dinv[None, :]

    def dot_bf16(p, q):
        return jnp.dot(p.astype(jnp.bfloat16), q.astype(jnp.bfloat16),
                       preferred_element_type=jnp.float32)

    # layer 0 reordered identically to the kernel
    h = jnp.tanh(dot_bf16(dot_bf16(a_hat, x), params["w0"]) + params["b0"])
    for i in range(1, 4):
        h = jnp.tanh(dot_bf16(a_hat, dot_bf16(h, params[f"w{i}"])) + params[f"b{i}"])

    mask = (batch_index[None, :] == jnp.arange(num_graphs)[:, None]
            ).astype(jnp.float32)
    cnt = jnp.maximum(jnp.sum(mask, axis=1, keepdims=True), 1.0)
    mean_pool = jax.lax.dot(mask, h, precision=jax.lax.Precision.HIGHEST) / cnt
    masked = jnp.where(mask[:, :, None] > 0.5, h[None, :, :], -3.0e38)
    max_pool = jnp.max(masked, axis=1)
    cat = jnp.concatenate([max_pool, mean_pool], axis=1)
    return (jax.lax.dot(cat, params["wout"], precision=jax.lax.Precision.HIGHEST)
            + params["bout"])


# ----------------------------------------------------------------------------
# Deterministic parameter init (Glorot-uniform; synthetic, not a checkpoint).
# ----------------------------------------------------------------------------
def init_params(key, num_features=9, embedding_size=64):
    def glorot(k, fan_in, fan_out):
        lim = jnp.sqrt(6.0 / (fan_in + fan_out))
        return jax.random.uniform(k, (fan_in, fan_out), jnp.float32, -lim, lim)

    ks = jax.random.split(key, 6)
    E = embedding_size
    return {
        "w0": glorot(ks[0], num_features, E), "b0": jnp.zeros((1, E), jnp.float32),
        "w1": glorot(ks[1], E, E),            "b1": jnp.zeros((1, E), jnp.float32),
        "w2": glorot(ks[2], E, E),            "b2": jnp.zeros((1, E), jnp.float32),
        "w3": glorot(ks[3], E, E),            "b3": jnp.zeros((1, E), jnp.float32),
        "wout": glorot(ks[4], 2 * E, 1),      "bout": jnp.zeros((1, 1), jnp.float32),
    }


if __name__ == "__main__":
    key = jax.random.PRNGKey(0)
    k_par, k_x, k_e = jax.random.split(key, 3)

    NUM_FEATURES = 9
    EMBEDDING = 64
    N_NODES = 16           # 2 graphs x 8 nodes
    NUM_GRAPHS = 2

    params = init_params(k_par, NUM_FEATURES, EMBEDDING)

    # node features
    x = jax.random.normal(k_x, (N_NODES, NUM_FEATURES), jnp.float32)

    # batch assignment: first 8 nodes -> graph 0, next 8 -> graph 1
    batch_index = jnp.concatenate([jnp.zeros(8, jnp.int32), jnp.ones(8, jnp.int32)])

    # random intra-graph directed edges (COO edge_index, shape [2, num_edges])
    ke0, ke1 = jax.random.split(k_e)
    src0 = jax.random.randint(ke0, (12,), 0, 8)
    dst0 = jax.random.randint(ke1, (12,), 0, 8)
    src1 = 8 + jax.random.randint(ke1, (12,), 0, 8)
    dst1 = 8 + jax.random.randint(ke0, (12,), 0, 8)
    edge_index = jnp.stack([jnp.concatenate([src0, src1]),
                            jnp.concatenate([dst0, dst1])]).astype(jnp.int32)

    out = gcn_forward(x, edge_index, batch_index, params, num_graphs=NUM_GRAPHS)
    out = jax.block_until_ready(out)

    ref = gcn_reference(x, edge_index, batch_index, params, num_graphs=NUM_GRAPHS)
    assert out.shape == (NUM_GRAPHS, 1)
    # bf16 matmul operands in both kernel and reference -> modest tolerance
    assert jnp.allclose(out, ref, rtol=1e-2, atol=1e-2), (out, ref)

    print("KERNEL_OK")
</pallas_src>

<mosaic_0001>
module attributes {stable_mosaic.version = 11 : i64} {
  func.func @gcn_kernel(%arg0: memref<16x16xbf16, #tpu.memory_space<vmem>>, %arg1: memref<16x9xbf16, #tpu.memory_space<vmem>>, %arg2: memref<9x64xbf16, #tpu.memory_space<vmem>>, %arg3: memref<3x64x64xbf16, #tpu.memory_space<vmem>>, %arg4: memref<8x64xf32, #tpu.memory_space<vmem>>, %arg5: memref<16x2xf32, #tpu.memory_space<vmem>>, %arg6: memref<2x1xf32, #tpu.memory_space<vmem>>) attributes {dimension_semantics = [], scalar_prefetch = 0 : i64, scratch_operands = 0 : i64, tpu.core_type = #tpu.core_type<tc>} {
    %c0 = arith.constant 0 : index
    %c0_0 = arith.constant 0 : index
    %0 = vector.load %arg0[%c0, %c0_0] : memref<16x16xbf16, #tpu.memory_space<vmem>>, vector<16x16xbf16>
    %c0_1 = arith.constant 0 : index
    %c0_2 = arith.constant 0 : index
    %1 = vector.load %arg1[%c0_1, %c0_2] : memref<16x9xbf16, #tpu.memory_space<vmem>>, vector<16x9xbf16>
    %cst = arith.constant dense<0.000000e+00> : vector<16x9xf32>
    %2 = tpu.matmul %0, %1, %cst {dimension_numbers = #tpu.dot_dimension_numbers<[1], [0], [0], [1], [0, 0, 1, 1], [], []>} : vector<16x16xbf16>, vector<16x9xbf16>, vector<16x9xf32> -> vector<16x9xf32>
    %3 = arith.truncf %2 : vector<16x9xf32> to vector<16x9xbf16>
    %c0_3 = arith.constant 0 : index
    %c0_4 = arith.constant 0 : index
    %4 = vector.load %arg2[%c0_3, %c0_4] : memref<9x64xbf16, #tpu.memory_space<vmem>>, vector<9x64xbf16>
    %cst_5 = arith.constant dense<0.000000e+00> : vector<16x64xf32>
    %5 = tpu.matmul %3, %4, %cst_5 {dimension_numbers = #tpu.dot_dimension_numbers<[1], [0], [0], [1], [0, 0, 1, 1], [], []>} : vector<16x9xbf16>, vector<9x64xbf16>, vector<16x64xf32> -> vector<16x64xf32>
    %c0_6 = arith.constant 0 : index
    %c0_7 = arith.constant 0 : index
    %6 = vector.load %arg4[%c0_6, %c0_7] : memref<8x64xf32, #tpu.memory_space<vmem>>, vector<1x64xf32>
    %7 = vector.broadcast %6 : vector<1x64xf32> to vector<16x64xf32>
    %8 = arith.addf %5, %7 : vector<16x64xf32>
    %9 = math.tanh %8 : vector<16x64xf32>
    %10 = arith.truncf %9 : vector<16x64xf32> to vector<16x64xbf16>
    %c0_8 = arith.constant 0 : index
    %c0_9 = arith.constant 0 : index
    %c0_10 = arith.constant 0 : index
    %11 = vector.load %arg3[%c0_8, %c0_9, %c0_10] : memref<3x64x64xbf16, #tpu.memory_space<vmem>>, vector<1x64x64xbf16>
    %12 = vector.shape_cast %11 : vector<1x64x64xbf16> to vector<64x64xbf16>
    %cst_11 = arith.constant dense<0.000000e+00> : vector<16x64xf32>
    %13 = tpu.matmul %10, %12, %cst_11 {dimension_numbers = #tpu.dot_dimension_numbers<[1], [0], [0], [1], [0, 0, 1, 1], [], []>} : vector<16x64xbf16>, vector<64x64xbf16>, vector<16x64xf32> -> vector<16x64xf32>
    %14 = arith.truncf %13 : vector<16x64xf32> to vector<16x64xbf16>
    %cst_12 = arith.constant dense<0.000000e+00> : vector<16x64xf32>
    %15 = tpu.matmul %0, %14, %cst_12 {dimension_numbers = #tpu.dot_dimension_numbers<[1], [0], [0], [1], [0, 0, 1, 1], [], []>} : vector<16x16xbf16>, vector<16x64xbf16>, vector<16x64xf32> -> vector<16x64xf32>
    %c1 = arith.constant 1 : index
    %c0_13 = arith.constant 0 : index
    %16 = vector.load %arg4[%c1, %c0_13] : memref<8x64xf32, #tpu.memory_space<vmem>>, vector<1x64xf32>
    %17 = vector.broadcast %16 : vector<1x64xf32> to vector<16x64xf32>
    %18 = arith.addf %15, %17 : vector<16x64xf32>
    %19 = math.tanh %18 : vector<16x64xf32>
    %20 = arith.truncf %19 : vector<16x64xf32> to vector<16x64xbf16>
    %c1_14 = arith.constant 1 : index
    %c0_15 = arith.constant 0 : index
    %c0_16 = arith.constant 0 : index
    %21 = vector.load %arg3[%c1_14, %c0_15, %c0_16] : memref<3x64x64xbf16, #tpu.memory_space<vmem>>, vector<1x64x64xbf16>
    %22 = vector.shape_cast %21 : vector<1x64x64xbf16> to vector<64x64xbf16>
    %cst_17 = arith.constant dense<0.000000e+00> : vector<16x64xf32>
    %23 = tpu.matmul %20, %22, %cst_17 {dimension_numbers = #tpu.dot_dimension_numbers<[1], [0], [0], [1], [0, 0, 1, 1], [], []>} : vector<16x64xbf16>, vector<64x64xbf16>, vector<16x64xf32> -> vector<16x64xf32>
    %24 = arith.truncf %23 : vector<16x64xf32> to vector<16x64xbf16>
    %cst_18 = arith.constant dense<0.000000e+00> : vector<16x64xf32>
    %25 = tpu.matmul %0, %24, %cst_18 {dimension_numbers = #tpu.dot_dimension_numbers<[1], [0], [0], [1], [0, 0, 1, 1], [], []>} : vector<16x16xbf16>, vector<16x64xbf16>, vector<16x64xf32> -> vector<16x64xf32>
    %c2 = arith.constant 2 : index
    %c0_19 = arith.constant 0 : index
    %26 = vector.load %arg4[%c2, %c0_19] : memref<8x64xf32, #tpu.memory_space<vmem>>, vector<1x64xf32>
    %27 = vector.broadcast %26 : vector<1x64xf32> to vector<16x64xf32>
    %28 = arith.addf %25, %27 : vector<16x64xf32>
    %29 = math.tanh %28 : vector<16x64xf32>
    %30 = arith.truncf %29 : vector<16x64xf32> to vector<16x64xbf16>
    %c2_20 = arith.constant 2 : index
    %c0_21 = arith.constant 0 : index
    %c0_22 = arith.constant 0 : index
    %31 = vector.load %arg3[%c2_20, %c0_21, %c0_22] : memref<3x64x64xbf16, #tpu.memory_space<vmem>>, vector<1x64x64xbf16>
    %32 = vector.shape_cast %31 : vector<1x64x64xbf16> to vector<64x64xbf16>
    %cst_23 = arith.constant dense<0.000000e+00> : vector<16x64xf32>
    %33 = tpu.matmul %30, %32, %cst_23 {dimension_numbers = #tpu.dot_dimension_numbers<[1], [0], [0], [1], [0, 0, 1, 1], [], []>} : vector<16x64xbf16>, vector<64x64xbf16>, vector<16x64xf32> -> vector<16x64xf32>
    %34 = arith.truncf %33 : vector<16x64xf32> to vector<16x64xbf16>
    %cst_24 = arith.constant dense<0.000000e+00> : vector<16x64xf32>
    %35 = tpu.matmul %0, %34, %cst_24 {dimension_numbers = #tpu.dot_dimension_numbers<[1], [0], [0], [1], [0, 0, 1, 1], [], []>} : vector<16x16xbf16>, vector<16x64xbf16>, vector<16x64xf32> -> vector<16x64xf32>
    %c3 = arith.constant 3 : index
    %c0_25 = arith.constant 0 : index
    %36 = vector.load %arg4[%c3, %c0_25] : memref<8x64xf32, #tpu.memory_space<vmem>>, vector<1x64xf32>
    %37 = vector.broadcast %36 : vector<1x64xf32> to vector<16x64xf32>
    %38 = arith.addf %35, %37 : vector<16x64xf32>
    %39 = math.tanh %38 : vector<16x64xf32>
    %c0_26 = arith.constant 0 : index
    %c0_27 = arith.constant 0 : index
    %40 = vector.load %arg5[%c0_26, %c0_27] : memref<16x2xf32, #tpu.memory_space<vmem>>, vector<16x2xf32>
    %c4 = arith.constant 4 : index
    %c0_28 = arith.constant 0 : index
    %41 = vector.load %arg4[%c4, %c0_28] : memref<8x64xf32, #tpu.memory_space<vmem>>, vector<1x64xf32>
    %c5 = arith.constant 5 : index
    %c0_29 = arith.constant 0 : index
    %42 = vector.load %arg4[%c5, %c0_29] : memref<8x64xf32, #tpu.memory_space<vmem>>, vector<1x64xf32>
    %c6 = arith.constant 6 : index
    %c0_30 = arith.constant 0 : index
    %43 = vector.load %arg4[%c6, %c0_30] : memref<8x64xf32, #tpu.memory_space<vmem>>, vector<1x1xf32>
    %44 = vector.broadcast %42 : vector<1x64xf32> to vector<16x64xf32>
    %45 = arith.mulf %39, %44 : vector<16x64xf32>
    %cst_31 = arith.constant dense<0.000000e+00> : vector<16xf32>
    %46 = vector.multi_reduction <add>, %45, %cst_31 [1] : vector<16x64xf32> to vector<16xf32>
    %47 = vector.shape_cast %46 : vector<16xf32> to vector<16x1xf32>
    %48 = vector.extract_strided_slice %40 {offsets = [0, 0], sizes = [16, 1], strides = [1, 1]} : vector<16x2xf32> to vector<16x1xf32>
    %cst_32 = arith.constant dense<0.000000e+00> : vector<1xf32>
    %49 = vector.multi_reduction <add>, %48, %cst_32 [0] : vector<16x1xf32> to vector<1xf32>
    %50 = vector.shape_cast %49 : vector<1xf32> to vector<1x1xf32>
    %cst_33 = arith.constant 1.000000e+00 : f32
    %51 = vector.broadcast %cst_33 : f32 to vector<1x1xf32>
    %52 = arith.maximumf %50, %51 : vector<1x1xf32>
    %53 = arith.mulf %47, %48 : vector<16x1xf32>
    %cst_34 = arith.constant dense<0.000000e+00> : vector<1xf32>
    %54 = vector.multi_reduction <add>, %53, %cst_34 [0] : vector<16x1xf32> to vector<1xf32>
    %55 = vector.shape_cast %54 : vector<1xf32> to vector<1x1xf32>
    %56 = arith.divf %55, %52 : vector<1x1xf32>
    %cst_35 = arith.constant 5.000000e-01 : f32
    %57 = vector.broadcast %cst_35 : f32 to vector<16x1xf32>
    %58 = arith.cmpf ogt, %48, %57 : vector<16x1xf32>
    %cst_36 = arith.constant -3.000000e+38 : f32
    %59 = vector.shape_cast %58 : vector<16x1xi1> to vector<16x1xi1>
    %60 = vector.broadcast %59 : vector<16x1xi1> to vector<16x64xi1>
    %61 = vector.broadcast %cst_36 : f32 to vector<16x64xf32>
    %62 = arith.select %60, %39, %61 : vector<16x64xi1>, vector<16x64xf32>
    %cst_37 = arith.constant dense<0xFF800000> : vector<64xf32>
    %63 = vector.multi_reduction <maximumf>, %62, %cst_37 [0] : vector<16x64xf32> to vector<64xf32>
    %64 = vector.shape_cast %63 : vector<64xf32> to vector<1x64xf32>
    %65 = arith.mulf %64, %41 : vector<1x64xf32>
    %cst_38 = arith.constant dense<0.000000e+00> : vector<1xf32>
    %66 = vector.multi_reduction <add>, %65, %cst_38 [1] : vector<1x64xf32> to vector<1xf32>
    %67 = vector.shape_cast %66 : vector<1xf32> to vector<1x1xf32>
    %68 = arith.addf %67, %56 : vector<1x1xf32>
    %69 = vector.extract_strided_slice %40 {offsets = [0, 1], sizes = [16, 1], strides = [1, 1]} : vector<16x2xf32> to vector<16x1xf32>
    %cst_39 = arith.constant dense<0.000000e+00> : vector<1xf32>
    %70 = vector.multi_reduction <add>, %69, %cst_39 [0] : vector<16x1xf32> to vector<1xf32>
    %71 = vector.shape_cast %70 : vector<1xf32> to vector<1x1xf32>
    %cst_40 = arith.constant 1.000000e+00 : f32
    %72 = vector.broadcast %cst_40 : f32 to vector<1x1xf32>
    %73 = arith.maximumf %71, %72 : vector<1x1xf32>
    %74 = arith.mulf %47, %69 : vector<16x1xf32>
    %cst_41 = arith.constant dense<0.000000e+00> : vector<1xf32>
    %75 = vector.multi_reduction <add>, %74, %cst_41 [0] : vector<16x1xf32> to vector<1xf32>
    %76 = vector.shape_cast %75 : vector<1xf32> to vector<1x1xf32>
    %77 = arith.divf %76, %73 : vector<1x1xf32>
    %cst_42 = arith.constant 5.000000e-01 : f32
    %78 = vector.broadcast %cst_42 : f32 to vector<16x1xf32>
    %79 = arith.cmpf ogt, %69, %78 : vector<16x1xf32>
    %cst_43 = arith.constant -3.000000e+38 : f32
    %80 = vector.shape_cast %79 : vector<16x1xi1> to vector<16x1xi1>
    %81 = vector.broadcast %80 : vector<16x1xi1> to vector<16x64xi1>
    %82 = vector.broadcast %cst_43 : f32 to vector<16x64xf32>
    %83 = arith.select %81, %39, %82 : vector<16x64xi1>, vector<16x64xf32>
    %cst_44 = arith.constant dense<0xFF800000> : vector<64xf32>
    %84 = vector.multi_reduction <maximumf>, %83, %cst_44 [0] : vector<16x64xf32> to vector<64xf32>
    %85 = vector.shape_cast %84 : vector<64xf32> to vector<1x64xf32>
    %86 = arith.mulf %85, %41 : vector<1x64xf32>
    %cst_45 = arith.constant dense<0.000000e+00> : vector<1xf32>
    %87 = vector.multi_reduction <add>, %86, %cst_45 [1] : vector<1x64xf32> to vector<1xf32>
    %88 = vector.shape_cast %87 : vector<1xf32> to vector<1x1xf32>
    %89 = arith.addf %88, %77 : vector<1x1xf32>
    %90 = tpu.concatenate %68, %89 in 0 : vector<1x1xf32>, vector<1x1xf32> -> vector<2x1xf32>
    %91 = vector.broadcast %43 : vector<1x1xf32> to vector<2x1xf32>
    %92 = arith.addf %90, %91 : vector<2x1xf32>
    %c0_46 = arith.constant 0 : index
    %c0_47 = arith.constant 0 : index
    %93 = vector.load %arg6[%c0_46, %c0_47] : memref<2x1xf32, #tpu.memory_space<vmem>>, vector<2x1xf32>
    tpu.vector_store %arg6[%c0_46, %c0_47], %92 {strides = array<i32>} : memref<2x1xf32, #tpu.memory_space<vmem>>, vector<2x1xf32>,
    return
  }
}

</mosaic_0001>

<llo_original>
// kernel: gcn_forward.1
$region0: #{gcn_forward.1}
  #allocation0 [shape = 'u32[]', space=smem, size = 0x4, offset = 0x4, fixed_abs, tag = 'smem constant byte address 0x4 - core index']
  #allocation1 [shape = 'u32[144,128]{1,0:T(1,128)}', space=vmem, size = 0x12000, scoped, tag = 'internal scratch']
  %s0 = inlined_call_operand.vmem [shape: bf16[16,16], index: 0, kind: input, shape index: {}]
  %s1 = inlined_call_operand.vmem [shape: bf16[16,9], index: 1, kind: input, shape index: {}]
  %s2 = inlined_call_operand.vmem [shape: bf16[9,64], index: 2, kind: input, shape index: {}]
  %s3 = inlined_call_operand.vmem [shape: bf16[3,64,64], index: 3, kind: input, shape index: {}]
  %s4 = inlined_call_operand.vmem [shape: f32[8,64], index: 4, kind: input, shape index: {}]
  %s5 = inlined_call_operand.vmem [shape: f32[16,2], index: 5, kind: input, shape index: {}]
  %s6 = inlined_call_operand.vmem [shape: f32[2,1], index: 6, kind: output, shape index: {}]
  %s7 = sld [smem:[#allocation0]]
  $region34: #{gcn_forward.1} parent=0
    _
  %s9 = ssub.s32 1, %s7
  %s10 = scalar_select 0, %s9, %s7
  // Predicated region
  $region2: #{gcn_forward.1} parent=0 // pred_check
    _
  $region3: #{gcn_forward.1} parent=0 // pred_check_branch
    %12 = sbr.rel (0) target = $region5
  $region4: #{gcn_forward.1} parent=0 // pred_region
    _
  $region5: #{gcn_forward.1} parent=0 // pred_fallthru
    _
  // Predicated region
  $region6: #{gcn_forward.1} parent=0 // pred_check
    _
  $region7: #{gcn_forward.1} parent=0 // pred_check_branch
    %14 = sbr.rel (0) target = $region9
  $region8: #{gcn_forward.1} parent=0 // pred_region
    _
  $region9: #{gcn_forward.1} parent=0 // pred_fallthru
    _
  // Predicated region
  $region10: #{gcn_forward.1} parent=0 // pred_check
    _
  $region11: #{gcn_forward.1} parent=0 // pred_check_branch
    %16 = sbr.rel (0) target = $region13
  $region12: #{gcn_forward.1} parent=0 // pred_region
    _
  $region13: #{gcn_forward.1} parent=0 // pred_fallthru
    _
  // Predicated region
  $region14: #{gcn_forward.1} parent=0 // pred_check
    _
  $region15: #{gcn_forward.1} parent=0 // pred_check_branch
    %18 = sbr.rel (0) target = $region17
  $region16: #{gcn_forward.1} parent=0 // pred_region
    _
  $region17: #{gcn_forward.1} parent=0 // pred_fallthru
    _
  // Predicated region
  $region18: #{gcn_forward.1} parent=0 // pred_check
    _
  $region19: #{gcn_forward.1} parent=0 // pred_check_branch
    %20 = sbr.rel (0) target = $region21
  $region20: #{gcn_forward.1} parent=0 // pred_region
    _
  $region21: #{gcn_forward.1} parent=0 // pred_fallthru
    _
  // Predicated region
  $region22: #{gcn_forward.1} parent=0 // pred_check
    _
  $region23: #{gcn_forward.1} parent=0 // pred_check_branch
    %22 = sbr.rel (0) target = $region25
  $region24: #{gcn_forward.1} parent=0 // pred_region
    _
  $region25: #{gcn_forward.1} parent=0 // pred_fallthru
    _
  %v24 = vld [vmem:[%s0] sm:$0xf]
  %v25 = vld [vmem:[%s0 + $0x4] sm:$0xf]
  %v26 = vld [vmem:[%s1] sm:$0xf]
  %v27 = vld [vmem:[%s1 + $0x4] sm:$0xf]
  %v30 = vunpack.c.l.b16 %v24
  %v31 = vunpack.c.l.b16 %v25
  %v32 = vpack.c.b16 %v31, %v30
  %v35 = vunpack.c.l.b16 %v26
  %v36 = vunpack.c.l.b16 %v27
  %v37 = vpack.c.b16 %v36, %v35
  %vm39 = vcmask 130048
  %v41 = vsel %vm39, %v32, 0
  %43 = vmatprep.subr.bf16.mxu0 0
  %44 = vmatpush1.bf16.msra.mxu0 0
  %45 = vmatprep.subr.bf16.mxu0 0
  %46 = vmatpush1.bf16.msra.mxu0 0
  %47 = vmatprep.subr.bf16.mxu0 0
  %48 = vmatpush1.bf16.msra.mxu0 0
  %49 = vmatprep.subr.bf16.mxu0 0
  %50 = vmatpush1.bf16.msra.mxu0 0
  %51 = vmatprep.subr.bf16.mxu0 0
  %52 = vmatpush1.bf16.msra.mxu0 0
  %53 = vmatprep.subr.bf16.mxu0 0
  %54 = vmatpush1.bf16.msra.mxu0 0
  %55 = vmatprep.subr.bf16.mxu0 0
  %56 = vmatpush1.bf16.msra.mxu0 0
  %57 = vmatprep.subr.bf16.mxu0 0
  %58 = vmatpush1.bf16.msra.mxu0 %v37
  %59 = vmatprep.subr.bf16.mxu0 0
  %60 = vmatpush2.bf16.msra.mxu0 0
  %61 = vmatprep.subr.bf16.mxu0 0
  %62 = vmatpush2.bf16.msra.mxu0 0
  %63 = vmatprep.subr.bf16.mxu0 0
  %64 = vmatpush2.bf16.msra.mxu0 0
  %65 = vmatprep.subr.bf16.mxu0 0
  %66 = vmatpush2.bf16.msra.mxu0 0
  %67 = vmatprep.subr.bf16.mxu0 0
  %68 = vmatpush2.bf16.msra.mxu0 0
  %69 = vmatprep.subr.bf16.mxu0 0
  %70 = vmatpush2.bf16.msra.mxu0 0
  %71 = vmatprep.subr.bf16.mxu0 0
  %72 = vmatpush2.bf16.msra.mxu0 0
  %73 = vmatprep.subr.bf16.mxu0 0
  %74 = vmatpush2.bf16.msra.mxu0 0
  %75 = vmatprep.mubr.bf16.mxu0 0
  %76 = vmatmul.mubr.bf16.gmra.mxu0 %v41
  %v77 = vpop.f32.mrf.mxu0
  %v78 = vadd.f32 0.0, %v77
  %v79 = vpop.f32.mrf.mxu0
  %v80 = vpop.f32.mrf.mxu0
  %v81 = vadd.f32 0.0, %v80
  %v82 = vpop.f32.mrf.mxu0
  %83 = vdwg.mxu0
  %v84 = vpack.c.bf16 %v81, %v78
  %v85 = vld [vmem:[%s2] sm:$0xf]
  %v86 = vld [vmem:[%s2 + $0x4] sm:$0x1]
  %v87 = vld [vmem:[%s4] sm:$0x1]
  %v88 = vlaneseq
  %v89 = vshrl.u32 %v88, 7
  %v90 = vsub.s32 0, %v89
  %v91 = vrot.slane %v87, %v90
  %v94 = vunpack.c.l.b16 %v85
  %v95 = vunpack.c.l.b16 %v86
  %v96 = vpack.c.b16 %v95, %v94
  %vm97 = vcmask 72704
  %v99 = vsel %vm97, %v84, 0
  %vm101 = vcmask 1043456
  %vm102 = vcmask 1044480
  %v103 = vsel %vm101, 4294967295, 65535
  %v104 = vsel %vm102, %v103, 0
  %v106 = vand.u32 %v96, %v104
  %108 = vmatprep.subr.bf16.mxu0 0
  %109 = vmatpush1.bf16.msra.mxu0 0
  %110 = vmatprep.subr.bf16.mxu0 0
  %111 = vmatpush1.bf16.msra.mxu0 0
  %112 = vmatprep.subr.bf16.mxu0 0
  %113 = vmatpush1.bf16.msra.mxu0 0
  %114 = vmatprep.subr.bf16.mxu0 0
  %115 = vmatpush1.bf16.msra.mxu0 0
  %116 = vmatprep.subr.bf16.mxu0 0
  %117 = vmatpush1.bf16.msra.mxu0 0
  %118 = vmatprep.subr.bf16.mxu0 0
  %119 = vmatpush1.bf16.msra.mxu0 0
  %120 = vmatprep.subr.bf16.mxu0 0
  %121 = vmatpush1.bf16.msra.mxu0 0
  %122 = vmatprep.subr.bf16.mxu0 0
  %123 = vmatpush1.bf16.msra.mxu0 %v106
  %124 = vmatprep.subr.bf16.mxu0 0
  %125 = vmatpush2.bf16.msra.mxu0 0
  %126 = vmatprep.subr.bf16.mxu0 0
  %127 = vmatpush2.bf16.msra.mxu0 0
  %128 = vmatprep.subr.bf16.mxu0 0
  %129 = vmatpush2.bf16.msra.mxu0 0
  %130 = vmatprep.subr.bf16.mxu0 0
  %131 = vmatpush2.bf16.msra.mxu0 0
  %132 = vmatprep.subr.bf16.mxu0 0
  %133 = vmatpush2.bf16.msra.mxu0 0
  %134 = vmatprep.subr.bf16.mxu0 0
  %135 = vmatpush2.bf16.msra.mxu0 0
  %136 = vmatprep.subr.bf16.mxu0 0
  %137 = vmatpush2.bf16.msra.mxu0 0
  %138 = vmatprep.subr.bf16.mxu0 0
  %139 = vmatpush2.bf16.msra.mxu0 0
  %140 = vmatprep.mubr.bf16.mxu0 0
  %141 = vmatmul.mubr.bf16.gmra.mxu0 %v99
  %v142 = vpop.f32.mrf.mxu0
  %v143 = vadd.f32 %v91, %v142
  %v144 = vpop.f32.mrf.mxu0
  %v145 = vpop.f32.mrf.mxu0
  %v146 = vadd.f32 %v91, %v145
  %v147 = vpop.f32.mrf.mxu0
  %148 = vdwg.mxu0
  %v149 = vtanh.pop %v143
  %v150 = vtanh.pop %v146
  %v151 = vpack.c.bf16 %v150, %v149
  %v152 = vld [vmem:[%s3] sm:$0xf]
  %v153 = vld [vmem:[%s3 + $0x4] sm:$0xf]
  %v154 = vld [vmem:[%s3 + $0x8] sm:$0xf]
  %v155 = vld [vmem:[%s3 + $0xc] sm:$0xf]
  %v156 = vld [vmem:[%s3 + $0x10] sm:$0xf]
  %v157 = vld [vmem:[%s3 + $0x14] sm:$0xf]
  %v158 = vld [vmem:[%s3 + $0x18] sm:$0xf]
  %v159 = vld [vmem:[%s3 + $0x1c] sm:$0xf]
  %v168 = vunpack.c.l.b16 %v152
  %v169 = vunpack.c.l.b16 %v153
  %v170 = vunpack.c.l.b16 %v154
  %v171 = vunpack.c.l.b16 %v155
  %v172 = vunpack.c.l.b16 %v156
  %v173 = vunpack.c.l.b16 %v157
  %v174 = vunpack.c.l.b16 %v158
  %v175 = vunpack.c.l.b16 %v159
  %v176 = vpack.c.b16 %v169, %v168
  %v177 = vpack.c.b16 %v171, %v170
  %v178 = vpack.c.b16 %v173, %v172
  %v179 = vpack.c.b16 %v175, %v174
  %vm184 = vcmask 523264
  %v186 = vsel %vm184, %v151, 0
  %188 = vmatprep.subr.bf16.mxu0 0
  %189 = vmatpush1.bf16.msra.mxu0 0
  %190 = vmatprep.subr.bf16.mxu0 0
  %191 = vmatpush1.bf16.msra.mxu0 0
  %192 = vmatprep.subr.bf16.mxu0 0
  %193 = vmatpush1.bf16.msra.mxu0 0
  %194 = vmatprep.subr.bf16.mxu0 0
  %195 = vmatpush1.bf16.msra.mxu0 0
  %196 = vmatprep.subr.bf16.mxu0 0
  %197 = vmatpush1.bf16.msra.mxu0 %v179
  %198 = vmatprep.subr.bf16.mxu0 0
  %199 = vmatpush1.bf16.msra.mxu0 %v178
  %200 = vmatprep.subr.bf16.mxu0 0
  %201 = vmatpush1.bf16.msra.mxu0 %v177
  %202 = vmatprep.subr.bf16.mxu0 0
  %203 = vmatpush1.bf16.msra.mxu0 %v176
  %204 = vmatprep.subr.bf16.mxu0 0
  %205 = vmatpush2.bf16.msra.mxu0 0
  %206 = vmatprep.subr.bf16.mxu0 0
  %207 = vmatpush2.bf16.msra.mxu0 0
  %208 = vmatprep.subr.bf16.mxu0 0
  %209 = vmatpush2.bf16.msra.mxu0 0
  %210 = vmatprep.subr.bf16.mxu0 0
  %211 = vmatpush2.bf16.msra.mxu0 0
  %212 = vmatprep.subr.bf16.mxu0 0
  %213 = vmatpush2.bf16.msra.mxu0 0
  %214 = vmatprep.subr.bf16.mxu0 0
  %215 = vmatpush2.bf16.msra.mxu0 0
  %216 = vmatprep.subr.bf16.mxu0 0
  %217 = vmatpush2.bf16.msra.mxu0 0
  %218 = vmatprep.subr.bf16.mxu0 0
  %219 = vmatpush2.bf16.msra.mxu0 0
  %220 = vmatprep.mubr.bf16.mxu0 0
  %221 = vmatmul.mubr.bf16.gmra.mxu0 %v186
  %v222 = vpop.f32.mrf.mxu0
  %v223 = vadd.f32 0.0, %v222
  %v224 = vpop.f32.mrf.mxu0
  %v225 = vpop.f32.mrf.mxu0
  %v226 = vadd.f32 0.0, %v225
  %v227 = vpop.f32.mrf.mxu0
  %228 = vdwg.mxu0
  %v229 = vpack.c.bf16 %v226, %v223
  %v230 = vld [vmem:[%s4 + $0x1] sm:$0x1]
  %v231 = vlaneseq
  %v232 = vshrl.u32 %v231, 7
  %v233 = vsub.s32 0, %v232
  %v234 = vrot.slane %v230, %v233
  %235 = vmatprep.subr.bf16.mxu0 0
  %236 = vmatpush1.bf16.msra.mxu0 0
  %237 = vmatprep.subr.bf16.mxu0 0
  %238 = vmatpush1.bf16.msra.mxu0 0
  %239 = vmatprep.subr.bf16.mxu0 0
  %240 = vmatpush1.bf16.msra.mxu0 0
  %241 = vmatprep.subr.bf16.mxu0 0
  %242 = vmatpush1.bf16.msra.mxu0 0
  %243 = vmatprep.subr.bf16.mxu0 0
  %244 = vmatpush1.bf16.msra.mxu0 0
  %245 = vmatprep.subr.bf16.mxu0 0
  %246 = vmatpush1.bf16.msra.mxu0 0
  %247 = vmatprep.subr.bf16.mxu0 0
  %248 = vmatpush1.bf16.msra.mxu0 0
  %249 = vmatprep.subr.bf16.mxu0 0
  %250 = vmatpush1.bf16.msra.mxu0 %v229
  %251 = vmatprep.subr.bf16.mxu0 0
  %252 = vmatpush2.bf16.msra.mxu0 0
  %253 = vmatprep.subr.bf16.mxu0 0
  %254 = vmatpush2.bf16.msra.mxu0 0
  %255 = vmatprep.subr.bf16.mxu0 0
  %256 = vmatpush2.bf16.msra.mxu0 0
  %257 = vmatprep.subr.bf16.mxu0 0
  %258 = vmatpush2.bf16.msra.mxu0 0
  %259 = vmatprep.subr.bf16.mxu0 0
  %260 = vmatpush2.bf16.msra.mxu0 0
  %261 = vmatprep.subr.bf16.mxu0 0
  %262 = vmatpush2.bf16.msra.mxu0 0
  %263 = vmatprep.subr.bf16.mxu0 0
  %264 = vmatpush2.bf16.msra.mxu0 0
  %265 = vmatprep.subr.bf16.mxu0 0
  %266 = vmatpush2.bf16.msra.mxu0 0
  %267 = vmatprep.mubr.bf16.mxu0 0
  %268 = vmatmul.mubr.bf16.gmra.mxu0 %v41
  %v269 = vpop.f32.mrf.mxu0
  %v270 = vadd.f32 %v234, %v269
  %v271 = vpop.f32.mrf.mxu0
  %v272 = vpop.f32.mrf.mxu0
  %v273 = vadd.f32 %v234, %v272
  %v274 = vpop.f32.mrf.mxu0
  %275 = vdwg.mxu0
  %v276 = vtanh.pop %v270
  %v277 = vtanh.pop %v273
  %v278 = vpack.c.bf16 %v277, %v276
  %s279 = scalar_lea.vmem %s3, 32
  %v280 = vld [vmem:[%s279] sm:$0xf]
  %v281 = vld [vmem:[%s279 + $0x4] sm:$0xf]
  %v282 = vld [vmem:[%s279 + $0x8] sm:$0xf]
  %v283 = vld [vmem:[%s279 + $0xc] sm:$0xf]
  %v284 = vld [vmem:[%s279 + $0x10] sm:$0xf]
  %v285 = vld [vmem:[%s279 + $0x14] sm:$0xf]
  %v286 = vld [vmem:[%s279 + $0x18] sm:$0xf]
  %v287 = vld [vmem:[%s279 + $0x1c] sm:$0xf]
  %v296 = vunpack.c.l.b16 %v280
  %v297 = vunpack.c.l.b16 %v281
  %v298 = vunpack.c.l.b16 %v282
  %v299 = vunpack.c.l.b16 %v283
  %v300 = vunpack.c.l.b16 %v284
  %v301 = vunpack.c.l.b16 %v285
  %v302 = vunpack.c.l.b16 %v286
  %v303 = vunpack.c.l.b16 %v287
  %v304 = vpack.c.b16 %v297, %v296
  %v305 = vpack.c.b16 %v299, %v298
  %v306 = vpack.c.b16 %v301, %v300
  %v307 = vpack.c.b16 %v303, %v302
  %v313 = vsel %vm184, %v278, 0
  %315 = vmatprep.subr.bf16.mxu0 0
  %316 = vmatpush1.bf16.msra.mxu0 0
  %317 = vmatprep.subr.bf16.mxu0 0
  %318 = vmatpush1.bf16.msra.mxu0 0
  %319 = vmatprep.subr.bf16.mxu0 0
  %320 = vmatpush1.bf16.msra.mxu0 0
  %321 = vmatprep.subr.bf16.mxu0 0
  %322 = vmatpush1.bf16.msra.mxu0 0
  %323 = vmatprep.subr.bf16.mxu0 0
  %324 = vmatpush1.bf16.msra.mxu0 %v307
  %325 = vmatprep.subr.bf16.mxu0 0
  %326 = vmatpush1.bf16.msra.mxu0 %v306
  %327 = vmatprep.subr.bf16.mxu0 0
  %328 = vmatpush1.bf16.msra.mxu0 %v305
  %329 = vmatprep.subr.bf16.mxu0 0
  %330 = vmatpush1.bf16.msra.mxu0 %v304
  %331 = vmatprep.subr.bf16.mxu0 0
  %332 = vmatpush2.bf16.msra.mxu0 0
  %333 = vmatprep.subr.bf16.mxu0 0
  %334 = vmatpush2.bf16.msra.mxu0 0
  %335 = vmatprep.subr.bf16.mxu0 0
  %336 = vmatpush2.bf16.msra.mxu0 0
  %337 = vmatprep.subr.bf16.mxu0 0
  %338 = vmatpush2.bf16.msra.mxu0 0
  %339 = vmatprep.subr.bf16.mxu0 0
  %340 = vmatpush2.bf16.msra.mxu0 0
  %341 = vmatprep.subr.bf16.mxu0 0
  %342 = vmatpush2.bf16.msra.mxu0 0
  %343 = vmatprep.subr.bf16.mxu0 0
  %344 = vmatpush2.bf16.msra.mxu0 0
  %345 = vmatprep.subr.bf16.mxu0 0
  %346 = vmatpush2.bf16.msra.mxu0 0
  %347 = vmatprep.mubr.bf16.mxu0 0
  %348 = vmatmul.mubr.bf16.gmra.mxu0 %v313
  %v349 = vpop.f32.mrf.mxu0
  %v350 = vadd.f32 0.0, %v349
  %v351 = vpop.f32.mrf.mxu0
  %v352 = vpop.f32.mrf.mxu0
  %v353 = vadd.f32 0.0, %v352
  %v354 = vpop.f32.mrf.mxu0
  %355 = vdwg.mxu0
  %v356 = vpack.c.bf16 %v353, %v350
  %v357 = vld [vmem:[%s4 + $0x2] sm:$0x1]
  %v358 = vlaneseq
  %v359 = vshrl.u32 %v358, 7
  %v360 = vsub.s32 0, %v359
  %v361 = vrot.slane %v357, %v360
  %362 = vmatprep.subr.bf16.mxu0 0
  %363 = vmatpush1.bf16.msra.mxu0 0
  %364 = vmatprep.subr.bf16.mxu0 0
  %365 = vmatpush1.bf16.msra.mxu0 0
  %366 = vmatprep.subr.bf16.mxu0 0
  %367 = vmatpush1.bf16.msra.mxu0 0
  %368 = vmatprep.subr.bf16.mxu0 0
  %369 = vmatpush1.bf16.msra.mxu0 0
  %370 = vmatprep.subr.bf16.mxu0 0
  %371 = vmatpush1.bf16.msra.mxu0 0
  %372 = vmatprep.subr.bf16.mxu0 0
  %373 = vmatpush1.bf16.msra.mxu0 0
  %374 = vmatprep.subr.bf16.mxu0 0
  %375 = vmatpush1.bf16.msra.mxu0 0
  %376 = vmatprep.subr.bf16.mxu0 0
  %377 = vmatpush1.bf16.msra.mxu0 %v356
  %378 = vmatprep.subr.bf16.mxu0 0
  %379 = vmatpush2.bf16.msra.mxu0 0
  %380 = vmatprep.subr.bf16.mxu0 0
  %381 = vmatpush2.bf16.msra.mxu0 0
  %382 = vmatprep.subr.bf16.mxu0 0
  %383 = vmatpush2.bf16.msra.mxu0 0
  %384 = vmatprep.subr.bf16.mxu0 0
  %385 = vmatpush2.bf16.msra.mxu0 0
  %386 = vmatprep.subr.bf16.mxu0 0
  %387 = vmatpush2.bf16.msra.mxu0 0
  %388 = vmatprep.subr.bf16.mxu0 0
  %389 = vmatpush2.bf16.msra.mxu0 0
  %390 = vmatprep.subr.bf16.mxu0 0
  %391 = vmatpush2.bf16.msra.mxu0 0
  %392 = vmatprep.subr.bf16.mxu0 0
  %393 = vmatpush2.bf16.msra.mxu0 0
  %394 = vmatprep.mubr.bf16.mxu0 0
  %395 = vmatmul.mubr.bf16.gmra.mxu0 %v41
  %v396 = vpop.f32.mrf.mxu0
  %v397 = vadd.f32 %v361, %v396
  %v398 = vpop.f32.mrf.mxu0
  %v399 = vpop.f32.mrf.mxu0
  %v400 = vadd.f32 %v361, %v399
  %v401 = vpop.f32.mrf.mxu0
  %402 = vdwg.mxu0
  %v403 = vtanh.pop %v397
  %v404 = vtanh.pop %v400
  %v405 = vpack.c.bf16 %v404, %v403
  %s406 = scalar_lea.vmem %s3, 64
  %v407 = vld [vmem:[%s406] sm:$0xf]
  %v408 = vld [vmem:[%s406 + $0x4] sm:$0xf]
  %v409 = vld [vmem:[%s406 + $0x8] sm:$0xf]
  %v410 = vld [vmem:[%s406 + $0xc] sm:$0xf]
  %v411 = vld [vmem:[%s406 + $0x10] sm:$0xf]
  %v412 = vld [vmem:[%s406 + $0x14] sm:$0xf]
  %v413 = vld [vmem:[%s406 + $0x18] sm:$0xf]
  %v414 = vld [vmem:[%s406 + $0x1c] sm:$0xf]
  %v423 = vunpack.c.l.b16 %v407
  %v424 = vunpack.c.l.b16 %v408
  %v425 = vunpack.c.l.b16 %v409
  %v426 = vunpack.c.l.b16 %v410
  %v427 = vunpack.c.l.b16 %v411
  %v428 = vunpack.c.l.b16 %v412
  %v429 = vunpack.c.l.b16 %v413
  %v430 = vunpack.c.l.b16 %v414
  %v431 = vpack.c.b16 %v424, %v423
  %v432 = vpack.c.b16 %v426, %v425
  %v433 = vpack.c.b16 %v428, %v427
  %v434 = vpack.c.b16 %v430, %v429
  %v440 = vsel %vm184, %v405, 0
  %442 = vmatprep.subr.bf16.mxu0 0
  %443 = vmatpush1.bf16.msra.mxu0 0
  %444 = vmatprep.subr.bf16.mxu0 0
  %445 = vmatpush1.bf16.msra.mxu0 0
  %446 = vmatprep.subr.bf16.mxu0 0
  %447 = vmatpush1.bf16.msra.mxu0 0
  %448 = vmatprep.subr.bf16.mxu0 0
  %449 = vmatpush1.bf16.msra.mxu0 0
  %450 = vmatprep.subr.bf16.mxu0 0
  %451 = vmatpush1.bf16.msra.mxu0 %v434
  %452 = vmatprep.subr.bf16.mxu0 0
  %453 = vmatpush1.bf16.msra.mxu0 %v433
  %454 = vmatprep.subr.bf16.mxu0 0
  %455 = vmatpush1.bf16.msra.mxu0 %v432
  %456 = vmatprep.subr.bf16.mxu0 0
  %457 = vmatpush1.bf16.msra.mxu0 %v431
  %458 = vmatprep.subr.bf16.mxu0 0
  %459 = vmatpush2.bf16.msra.mxu0 0
  %460 = vmatprep.subr.bf16.mxu0 0
  %461 = vmatpush2.bf16.msra.mxu0 0
  %462 = vmatprep.subr.bf16.mxu0 0
  %463 = vmatpush2.bf16.msra.mxu0 0
  %464 = vmatprep.subr.bf16.mxu0 0
  %465 = vmatpush2.bf16.msra.mxu0 0
  %466 = vmatprep.subr.bf16.mxu0 0
  %467 = vmatpush2.bf16.msra.mxu0 0
  %468 = vmatprep.subr.bf16.mxu0 0
  %469 = vmatpush2.bf16.msra.mxu0 0
  %470 = vmatprep.subr.bf16.mxu0 0
  %471 = vmatpush2.bf16.msra.mxu0 0
  %472 = vmatprep.subr.bf16.mxu0 0
  %473 = vmatpush2.bf16.msra.mxu0 0
  %474 = vmatprep.mubr.bf16.mxu0 0
  %475 = vmatmul.mubr.bf16.gmra.mxu0 %v440
  %v476 = vpop.f32.mrf.mxu0
  %v477 = vadd.f32 0.0, %v476
  %v478 = vpop.f32.mrf.mxu0
  %v479 = vpop.f32.mrf.mxu0
  %v480 = vadd.f32 0.0, %v479
  %v481 = vpop.f32.mrf.mxu0
  %482 = vdwg.mxu0
  %v483 = vpack.c.bf16 %v480, %v477
  %v484 = vld [vmem:[%s4 + $0x3] sm:$0x1]
  %v485 = vlaneseq
  %v486 = vshrl.u32 %v485, 7
  %v487 = vsub.s32 0, %v486
  %v488 = vrot.slane %v484, %v487
  %489 = vmatprep.subr.bf16.mxu0 0
  %490 = vmatpush1.bf16.msra.mxu0 0
  %491 = vmatprep.subr.bf16.mxu0 0
  %492 = vmatpush1.bf16.msra.mxu0 0
  %493 = vmatprep.subr.bf16.mxu0 0
  %494 = vmatpush1.bf16.msra.mxu0 0
  %495 = vmatprep.subr.bf16.mxu0 0
  %496 = vmatpush1.bf16.msra.mxu0 0
  %497 = vmatprep.subr.bf16.mxu0 0
  %498 = vmatpush1.bf16.msra.mxu0 0
  %499 = vmatprep.subr.bf16.mxu0 0
  %500 = vmatpush1.bf16.msra.mxu0 0
  %501 = vmatprep.subr.bf16.mxu0 0
  %502 = vmatpush1.bf16.msra.mxu0 0
  %503 = vmatprep.subr.bf16.mxu0 0
  %504 = vmatpush1.bf16.msra.mxu0 %v483
  %505 = vmatprep.subr.bf16.mxu0 0
  %506 = vmatpush2.bf16.msra.mxu0 0
  %507 = vmatprep.subr.bf16.mxu0 0
  %508 = vmatpush2.bf16.msra.mxu0 0
  %509 = vmatprep.subr.bf16.mxu0 0
  %510 = vmatpush2.bf16.msra.mxu0 0
  %511 = vmatprep.subr.bf16.mxu0 0
  %512 = vmatpush2.bf16.msra.mxu0 0
  %513 = vmatprep.subr.bf16.mxu0 0
  %514 = vmatpush2.bf16.msra.mxu0 0
  %515 = vmatprep.subr.bf16.mxu0 0
  %516 = vmatpush2.bf16.msra.mxu0 0
  %517 = vmatprep.subr.bf16.mxu0 0
  %518 = vmatpush2.bf16.msra.mxu0 0
  %519 = vmatprep.subr.bf16.mxu0 0
  %520 = vmatpush2.bf16.msra.mxu0 0
  %521 = vmatprep.mubr.bf16.mxu0 0
  %522 = vmatmul.mubr.bf16.gmra.mxu0 %v41
  %v523 = vpop.f32.mrf.mxu0
  %v524 = vadd.f32 %v488, %v523
  %v525 = vpop.f32.mrf.mxu0
  %v526 = vpop.f32.mrf.mxu0
  %v527 = vadd.f32 %v488, %v526
  %v528 = vpop.f32.mrf.mxu0
  %529 = vdwg.mxu0
  %v530 = vtanh.pop %v524
  %v531 = vtanh.pop %v527
  %v532 = vld [vmem:[%s5] sm:$0xff]
  %v533 = vld [vmem:[%s5 + $0x8] sm:$0xff]
  %v534 = vld [vmem:[%s4 + $0x4] sm:$0x1]
  %v535 = vld [vmem:[%s4 + $0x5] sm:$0x1]
  %v536 = vld [vmem:[%s4 + $0x6] sm:$0x1]
  %v537 = vlaneseq
  %v538 = vshrl.u32 %v537, 7
  %v539 = vsub.s32 0, %v538
  %v540 = vrot.slane %v535, %v539
  %v541 = vmul.f32 %v530, %v540
  %v542 = vmul.f32 %v531, %v540
  %v543 = vsel %vm184, %v541, 0.0
  %544 = vadd.xlane.f32.xlu0 %v543
  %v545 = vpop.xlane.xlu0 %544
  %v546 = vsel %vm184, %v542, 0.0
  %547 = vadd.xlane.f32.xlu0 %v546
  %v548 = vpop.xlane.xlu0 %547
  %vm549 = vcmask 7168
  %v550 = vsel %vm549, %v532, 0.0
  %v551 = vsel %vm549, %v533, 0.0
  %v552 = vadd.f32 %v550, %v551
  %v553 = vrot.slane %v552, 4
  %v554 = vadd.f32 %v552, %v553
  %v555 = vrot.slane %v554, 2
  %v556 = vadd.f32 %v554, %v555
  %v557 = vrot.slane %v556, 1
  %v558 = vadd.f32 %v556, %v557
  %v559 = vmax.f32 %v558, 1.0
  %v560 = vmul.f32 %v545, %v532
  %v561 = vmul.f32 %v548, %v533
  %v562 = vsel %vm549, %v560, 0.0
  %v563 = vsel %vm549, %v561, 0.0
  %v564 = vadd.f32 %v562, %v563
  %v565 = vrot.slane %v564, 4
  %v566 = vadd.f32 %v564, %v565
  %v567 = vrot.slane %v566, 2
  %v568 = vadd.f32 %v566, %v567
  %v569 = vrot.slane %v568, 1
  %v570 = vadd.f32 %v568, %v569
  %v571 = vrcp.pop %v559
  %v572 = vmul.f32 %v570, %v571
  %vm573 = vcmp.gt.f32.partialorder %v532, 0.5
  %vm574 = vcmp.gt.f32.partialorder %v533, 0.5
  %v575 = vsel %vm573, 1, 0
  %v576 = vsel %vm574, 1, 0
  %577 = vset.pattern.permute.xlu0 0
  %578 = vperm.xlu0 %577, %v575
  %v579 = vpop.permute.xlu0 %578
  %580 = vset.pattern.permute.xlu0 0
  %581 = vperm.xlu0 %580, %v576
  %v582 = vpop.permute.xlu0 %581
  %vm583 = vcmp.eq.s32.totalorder %v579, 1
  %vm584 = vcmp.eq.s32.totalorder %v582, 1
  %v585 = vsel %vm583, %v530, -3e+38
  %v586 = vsel %vm584, %v531, -3e+38
  %v587 = vsel %vm184, %v585, -inf
  %v588 = vsel %vm184, %v586, -inf
  %v589 = vmax.f32 %v587, %v588
  %v590 = vrot.slane %v589, 4
  %v591 = vmax.f32 %v589, %v590
  %v592 = vrot.slane %v591, 2
  %v593 = vmax.f32 %v591, %v592
  %v594 = vrot.slane %v593, 1
  %v595 = vmax.f32 %v593, %v594
  %v596 = vmul.f32 %v595, %v534
  %vm597 = vcmask 516096
  %v598 = vsel %vm597, %v596, 0.0
  %599 = vadd.xlane.f32.xlu0 %v598
  %v600 = vpop.xlane.xlu0 %599
  %v601 = vadd.f32 %v600, %v572
  %vm602 = vcmask 15368
  %v603 = vsel %vm602, %v532, 0.0
  %v604 = vsel %vm602, %v533, 0.0
  %v605 = vadd.f32 %v603, %v604
  %v606 = vrot.slane %v605, 4
  %v607 = vadd.f32 %v605, %v606
  %v608 = vrot.slane %v607, 2
  %v609 = vadd.f32 %v607, %v608
  %v610 = vrot.slane %v609, 1
  %v611 = vadd.f32 %v609, %v610
  %v612 = vmax.f32 %v611, 1.0
  %v613 = vsel %vm602, %v560, 0.0
  %v614 = vsel %vm602, %v561, 0.0
  %v615 = vadd.f32 %v613, %v614
  %v616 = vrot.slane %v615, 4
  %v617 = vadd.f32 %v615, %v616
  %v618 = vrot.slane %v617, 2
  %v619 = vadd.f32 %v617, %v618
  %v620 = vrot.slane %v619, 1
  %v621 = vadd.f32 %v619, %v620
  %v622 = vrcp.pop %v612
  %v623 = vmul.f32 %v621, %v622
  %624 = vset.pattern.permute.xlu0 1
  %625 = vperm.xlu0 %624, %v575
  %v626 = vpop.permute.xlu0 %625
  %627 = vset.pattern.permute.xlu0 1
  %628 = vperm.xlu0 %627, %v576
  %v629 = vpop.permute.xlu0 %628
  %vm630 = vcmp.eq.s32.totalorder %v626, 1
  %vm631 = vcmp.eq.s32.totalorder %v629, 1
  %v632 = vsel %vm630, %v530, -3e+38
  %v633 = vsel %vm631, %v531, -3e+38
  %v634 = vsel %vm184, %v632, -inf
  %v635 = vsel %vm184, %v633, -inf
  %v636 = vmax.f32 %v634, %v635
  %v637 = vrot.slane %v636, 4
  %v638 = vmax.f32 %v636, %v637
  %v639 = vrot.slane %v638, 2
  %v640 = vmax.f32 %v638, %v639
  %v641 = vrot.slane %v640, 1
  %v642 = vmax.f32 %v640, %v641
  %v643 = vmul.f32 %v642, %v534
  %v644 = vsel %vm597, %v643, 0.0
  %645 = vadd.xlane.f32.xlu0 %v644
  %v646 = vpop.xlane.xlu0 %645
  %v647 = vadd.f32 %v646, %v623
  %v649 = vrot.slane %v647, 7
  %650 = vrot.lane.b32.xlu0 %v649, 127
  %v651 = vpop.permute.xlu0 %650
  %vm653 = vcmask 1040384
  %v654 = vsel %vm653, %v601, %v651
  %v655 = vlaneseq
  %v656 = vshrl.u32 %v655, 7
  %v657 = vsub.s32 0, %v656
  %v658 = vrot.slane %v536, %v657
  %v659 = vadd.f32 %v654, %v658
  %vm660 = vcmask 1024
  %661 = vst.msk [vmem:[%s6] sm:$0x3] %vm660, %v659
  // Predicated region
  $region26: #{gcn_forward.1} parent=0 // pred_check
    _
  $region27: #{gcn_forward.1} parent=0 // pred_check_branch
    %663 = sbr.rel (0) target = $region29
  $region28: #{gcn_forward.1} parent=0 // pred_region
    _
  $region29: #{gcn_forward.1} parent=0 // pred_fallthru
    _
  // Predicated region
  $region30: #{gcn_forward.1} parent=0 // pred_check
    _
  $region31: #{gcn_forward.1} parent=0 // pred_check_branch
    %665 = sbr.rel (0) target = $region33
  $region32: #{gcn_forward.1} parent=0 // pred_region
    _
  $region33: #{gcn_forward.1} parent=0 // pred_fallthru
    _

</llo_original>
